<compile_context>
chip_gen: v5e
topology: v5e:2x2
jax: 0.10.0
libtpu: 0.0.40
codegen_flags: <defaults>
</compile_context>

<pallas_src>
import functools

import jax
import jax.numpy as jnp
from jax.experimental import pallas as pl
from jax.experimental.pallas import tpu as pltpu


def st_conv_block_kernel(
    xs1_ref,    # (B*t1, Kpad)        f32   im2col'd conv1 input (K zero-padded to 128 mult.)
    xal_ref,    # (B*t1, nc1)         f32   align(x)[:, :, kt-1:, :] residual (GLU a-half)
    w1_ref,     # (Kpad, 2*nc1)       bf16  conv1 weight, GLU halves side by side
    wg_ref,     # (nc1, nc1)          bf16  Chebyshev graph-conv weight (no +I fold)
    w2_ref,     # (kt, nc1, nc2)      bf16  conv2 per-tap weights (no identity fold)
    pvec_ref,   # (6, max(nc1,nc2))   f32   rows: b1a, b1b, bs, b2, gamma, beta
    o_ref,      # (B, t2, nc2)        f32
    *, B, kt, t1, t2, nc1, nc2, eps,
):
    # hoist small broadcast vectors (JAX does not CSE broadcast_in_dim in loops)
    b1a = pvec_ref[0:1, :nc1]
    b1b = pvec_ref[1:2, :nc1]
    bsv = pvec_ref[2:3, :nc1]
    b2v = pvec_ref[3:4, :nc2]
    gamma = pvec_ref[4:5, :nc2]
    beta = pvec_ref[5:6, :nc2]

    # ---------------- temporal conv 1 (GLU): ONE matmul at M = B*t1 ----------------
    w1 = w1_ref[...].astype(jnp.float32)
    y1 = jnp.dot(xs1_ref[...], w1, preferred_element_type=jnp.float32)   # (B*t1, 2*nc1)
    ya = y1[:, :nc1] + b1a + xal_ref[...]        # conv-a + bias + align residual
    yb = y1[:, nc1:] + b1b                       # gate half
    x_t1 = ya * jax.nn.sigmoid(yb)               # (B*t1, nc1)

    # ------------- spatial graph conv: ONE (nc1, nc1) matmul + residual, ReLU -------------
    wg = wg_ref[...].astype(jnp.float32)
    x_s = jnp.maximum(
        jnp.dot(x_t1, wg, preferred_element_type=jnp.float32) + bsv + x_t1, 0.0)

    # -------- temporal conv 2 (ReLU) + LayerNorm: per batch, kt accumulating matmuls --------
    # (temporal windows must not cross batch boundaries, so unroll B=2 here)
    w2taps = [w2_ref[dt].astype(jnp.float32) for dt in range(kt)]
    for b in range(B):
        base = b * t1
        acc = b2v + x_s[base + kt - 1:base + kt - 1 + t2, :]     # bias + identity residual
        for dt in range(kt):
            acc = acc + jnp.dot(x_s[base + dt:base + dt + t2, :], w2taps[dt],
                                preferred_element_type=jnp.float32)
        x_t2 = jnp.maximum(acc, 0.0)                             # (t2, nc2)

        # LayerNorm over (N, C) == the dense 128-wide lane axis
        mean = jnp.mean(x_t2, axis=-1, keepdims=True)
        var = jnp.mean((x_t2 - mean) ** 2, axis=-1, keepdims=True)
        x_ln = (x_t2 - mean) * jax.lax.rsqrt(var + eps)
        # dropout: eval-mode identity
        # TODO(synk): training-mode dropout (pltpu.prng_seed/prng_random_bits mask + 1/(1-p)) not implemented.
        o_ref[b] = x_ln * gamma + beta


def _pack_weights(params, *, kt, N, c0, c1, c2, k_pad):
    """Pre-fuse the linear stages into dense (bf16) matrices + one packed f32 bias table.

    Residual identities are kept OUT of the weights (explicit adds in the kernel)
    so the bf16 entries stay small-magnitude (better quantization)."""
    w1, b1, Lk, theta, bs, w2, b2, gamma, beta = params
    eye_n = jnp.eye(N, dtype=jnp.float32)

    # conv1: block-diagonal-over-nodes im2col weight, GLU halves side by side, K zero-padded
    W1a = jnp.einsum('nm,dio->dnimo', eye_n, w1[:, :, :c1]).reshape(kt * N * c0, N * c1)
    W1b = jnp.einsum('nm,dio->dnimo', eye_n, w1[:, :, c1:]).reshape(kt * N * c0, N * c1)
    W1 = jnp.concatenate([W1a, W1b], axis=1)                      # (kt*N*c0, 2*N*c1)
    W1 = jnp.pad(W1, ((0, k_pad - kt * N * c0), (0, 0)))          # lane-dense K

    # graph conv: Wg[m*c1+i, n*c1+o] = sum_k Lk[k,n,m] * theta[i,o,k]
    Wg = jnp.einsum('knm,iok->mino', Lk, theta).reshape(N * c1, N * c1)

    # conv2: per-tap block-diagonal weights (kt, N*c1, N*c2)
    # TODO(synk): the block-diagonal structure is stored dense; exploit it before scaling N/c.
    W2 = jnp.einsum('nm,dio->dnimo', eye_n, w2).reshape(kt, N * c1, N * c2)

    nc1, nc2 = N * c1, N * c2
    ncmax = max(nc1, nc2)
    pad = lambda v: jnp.pad(v.astype(jnp.float32), (0, ncmax - v.shape[0]))
    pvec = jnp.stack([
        pad(jnp.tile(b1[:c1], N)),       # conv1 bias, a-half   (lane n*c1 + o)
        pad(jnp.tile(b1[c1:], N)),       # conv1 bias, gate half
        pad(jnp.tile(bs, N)),            # graph conv bias
        pad(jnp.tile(b2, N)),            # conv2 bias
        pad(gamma.reshape(nc2)),         # LayerNorm gamma (N, c2) -> lane n*c2 + o
        pad(beta.reshape(nc2)),          # LayerNorm beta
    ])                                   # (6, ncmax), kept f32
    return (W1.astype(jnp.bfloat16), Wg.astype(jnp.bfloat16),
            W2.astype(jnp.bfloat16), pvec)


def st_conv_block_pallas(x_nchw, params, *, kt, ks, eps=1e-5):
    """x_nchw: (B, c0, T, N) float32.  Returns (B, c2, T - 2*(kt-1), N)."""
    w1, b1, Lk, theta, bs, w2, b2, gamma, beta = params
    B, c0, T, N = x_nchw.shape
    c1 = theta.shape[0]
    c2 = w2.shape[2]
    if c0 > c1 or c1 > c2:
        # TODO(synk): 1x1-conv `align` path (c_in > c_out) not implemented (needs its own weights).
        raise NotImplementedError("only the zero-pad align path (c_in <= c_out) is supported")

    t1 = T - (kt - 1)
    t2 = T - 2 * (kt - 1)
    nc0, nc1, nc2 = N * c0, N * c1, N * c2
    ncmax = max(nc1, nc2)
    k_raw = kt * nc0
    k_pad = ((k_raw + 127) // 128) * 128           # lane-dense K for conv1

    # lane-dense relayout at the boundary: (B, c0, T, N) -> (B, T, N*c0)
    x = jnp.transpose(x_nchw, (0, 2, 3, 1)).reshape(B, T, nc0).astype(jnp.float32)

    # wrapper-side im2col for conv1 (tiny extra activation traffic vs. weight DMA)
    xs1 = jnp.concatenate([x[:, dt:dt + t1, :] for dt in range(kt)], axis=-1)   # (B, t1, kt*nc0)
    xs1 = jnp.pad(xs1, ((0, 0), (0, 0), (0, k_pad - k_raw))).reshape(B * t1, k_pad)

    # align(x)[:, :, kt-1:, :] residual for the GLU a-half, in the (n*c1 + i) lane layout
    x_al = x[:, kt - 1:, :].reshape(B, t1, N, c0)
    x_al = jnp.pad(x_al, ((0, 0), (0, 0), (0, 0), (0, c1 - c0))).reshape(B * t1, nc1)

    W1, Wg, W2, pvec = _pack_weights(params, kt=kt, N=N, c0=c0, c1=c1, c2=c2, k_pad=k_pad)

    kernel = functools.partial(st_conv_block_kernel, B=B, kt=kt, t1=t1, t2=t2,
                               nc1=nc1, nc2=nc2, eps=eps)

    m1 = B * t1
    cost = pl.CostEstimate(
        flops=2 * (m1 * k_pad * 2 * nc1 + m1 * nc1 * nc1 + B * kt * t2 * nc1 * nc2),
        transcendentals=m1 * nc1 + B * t2,
        bytes_accessed=(4 * (m1 * k_pad + m1 * nc1 + 6 * ncmax + B * t2 * nc2)
                        + 2 * (k_pad * 2 * nc1 + nc1 * nc1 + kt * nc1 * nc2)),
    )

    out_dense = pl.pallas_call(
        kernel,
        out_shape=jax.ShapeDtypeStruct((B, t2, nc2), jnp.float32),
        grid_spec=pl.GridSpec(
            grid=(1,),     # single step: batch is folded into the matmul M dimension
            in_specs=[
                pl.BlockSpec((B * t1, k_pad), lambda i: (0, 0)),
                pl.BlockSpec((B * t1, nc1), lambda i: (0, 0)),
                pl.BlockSpec((k_pad, 2 * nc1), lambda i: (0, 0)),
                pl.BlockSpec((nc1, nc1), lambda i: (0, 0)),
                pl.BlockSpec((kt, nc1, nc2), lambda i: (0, 0, 0)),
                pl.BlockSpec((6, ncmax), lambda i: (0, 0)),
            ],
            out_specs=pl.BlockSpec((B, t2, nc2), lambda i: (0, 0, 0)),
        ),
        compiler_params=pltpu.CompilerParams(
            dimension_semantics=("arbitrary",),
            vmem_limit_bytes=32 * 1024 * 1024,
        ),
        cost_estimate=cost,
    )(xs1, x_al, W1, Wg, W2, pvec)

    # back to NCHW: (B, t2, N*c2) -> (B, c2, t2, N)
    return jnp.transpose(out_dense.reshape(B, t2, N, c2), (0, 3, 1, 2))


def st_conv_block_reference(x, params, *, kt, ks):
    """Pure-JAX f32 reference mirroring the PyTorch forward (NCHW), eval mode."""
    w1, b1, Lk, theta, bs, w2, b2, gamma, beta = params
    B, c0, T, N = x.shape
    c1 = theta.shape[0]
    c2 = w2.shape[2]
    t1 = T - kt + 1

    # tconv1 (GLU)
    y = jnp.zeros((B, 2 * c1, t1, N), jnp.float32)
    for dt in range(kt):
        y = y + jnp.einsum('io,bitn->botn', w1[dt], x[:, :, dt:dt + t1, :])
    y = y + b1[None, :, None, None]
    x_al = jnp.pad(x, ((0, 0), (0, c1 - c0), (0, 0), (0, 0)))[:, :, kt - 1:, :]
    x_t1 = (y[:, :c1] + x_al) * jax.nn.sigmoid(y[:, c1:])

    # spatio conv
    x_c = jnp.einsum('knm,bitm->bitkn', Lk, x_t1)
    x_gc = jnp.einsum('iok,bitkn->botn', theta, x_c) + bs[None, :, None, None]
    x_s = jax.nn.relu(x_gc + x_t1)

    # tconv2 (ReLU)
    t2 = t1 - kt + 1
    y2 = jnp.zeros((B, c2, t2, N), jnp.float32)
    for dt in range(kt):
        y2 = y2 + jnp.einsum('io,bitn->botn', w2[dt], x_s[:, :, dt:dt + t2, :])
    y2 = y2 + b2[None, :, None, None]
    x_t2 = jax.nn.relu(y2 + x_s[:, :, kt - 1:, :])

    # LayerNorm([n, c2]) on (B, T, N, C)
    xp = jnp.transpose(x_t2, (0, 2, 3, 1))
    mean = xp.mean(axis=(2, 3), keepdims=True)
    var = ((xp - mean) ** 2).mean(axis=(2, 3), keepdims=True)
    xn = (xp - mean) / jnp.sqrt(var + 1e-5) * gamma + beta
    return jnp.transpose(xn, (0, 3, 1, 2))        # dropout = identity (eval)


def init_params(key, *, c0, c1, c2, kt, ks, n):
    """Deterministic synthetic init mimicking the PyTorch shapes / init bounds."""
    ks_ = jax.random.split(key, 8)
    bnd1 = 1.0 / (c0 * kt) ** 0.5
    w1 = jax.random.uniform(ks_[0], (kt, c0, 2 * c1), jnp.float32, -bnd1, bnd1)
    b1 = jax.random.uniform(ks_[1], (2 * c1,), jnp.float32, -bnd1, bnd1)
    bnds = 1.0 / (c1 * ks) ** 0.5
    theta = jax.random.uniform(ks_[2], (c1, c1, ks), jnp.float32, -bnds, bnds)
    bs = jax.random.uniform(ks_[3], (c1,), jnp.float32, -bnds, bnds)
    bnd2 = 1.0 / (c1 * kt) ** 0.5
    w2 = jax.random.uniform(ks_[4], (kt, c1, c2), jnp.float32, -bnd2, bnd2)
    b2 = jax.random.uniform(ks_[5], (c2,), jnp.float32, -bnd2, bnd2)
    gamma = jnp.ones((n, c2), jnp.float32)
    beta = jnp.zeros((n, c2), jnp.float32)
    Lk = jax.random.uniform(ks_[6], (ks, n, n), jnp.float32, -0.5, 0.5)
    return (w1, b1, Lk, theta, bs, w2, b2, gamma, beta)


if __name__ == "__main__":
    B, T, N = 2, 12, 16
    kt, ks = 3, 3
    c = [4, 8, 8]     # (c_in, c_hidden, c_out); N*c1 = N*c2 = 128 -> lane-dense

    key = jax.random.PRNGKey(0)
    kx, kp = jax.random.split(key)
    x = jax.random.normal(kx, (B, c[0], T, N), jnp.float32)   # NCHW like PyTorch
    params = init_params(kp, c0=c[0], c1=c[1], c2=c[2], kt=kt, ks=ks, n=N)

    out = st_conv_block_pallas(x, params, kt=kt, ks=ks)
    out = jax.block_until_ready(out)

    ref = jax.block_until_ready(st_conv_block_reference(x, params, kt=kt, ks=ks))
    assert out.shape == (B, c[2], T - 2 * (kt - 1), N), out.shape
    max_err = float(jnp.max(jnp.abs(out - ref)))
    # f32-weight variant validated at 2e-3; the bf16 weight quantization (weights only,
    # f32 activations/accumulation, no identity folds) adds a few 1e-3 of error headroom.
    assert max_err < 2e-2, f"max abs err {max_err}"

    print("KERNEL_OK")
</pallas_src>

<mosaic_0001>
module attributes {stable_mosaic.version = 11 : i64} {
  func.func @st_conv_block_kernel(%arg0: i32, %arg1: memref<20x256xf32, #tpu.memory_space<vmem>>, %arg2: memref<20x128xf32, #tpu.memory_space<vmem>>, %arg3: memref<256x256xbf16, #tpu.memory_space<vmem>>, %arg4: memref<128x128xbf16, #tpu.memory_space<vmem>>, %arg5: memref<3x128x128xbf16, #tpu.memory_space<vmem>>, %arg6: memref<6x128xf32, #tpu.memory_space<vmem>>, %arg7: memref<2x8x128xf32, #tpu.memory_space<vmem>>) attributes {dimension_semantics = [#tpu.dimension_semantics<arbitrary>], iteration_bounds = array<i64: 1>, scalar_prefetch = 0 : i64, scratch_operands = 0 : i64, tpu.core_type = #tpu.core_type<tc>, window_params = [{pipeline_mode = #tpu.pipeline_mode<synchronous>, transform_indices = @transform_0, window_bounds = array<i64: 20, 256>}, {pipeline_mode = #tpu.pipeline_mode<synchronous>, transform_indices = @transform_1, window_bounds = array<i64: 20, 128>}, {pipeline_mode = #tpu.pipeline_mode<synchronous>, transform_indices = @transform_2, window_bounds = array<i64: 256, 256>}, {pipeline_mode = #tpu.pipeline_mode<synchronous>, transform_indices = @transform_3, window_bounds = array<i64: 128, 128>}, {pipeline_mode = #tpu.pipeline_mode<synchronous>, transform_indices = @transform_4, window_bounds = array<i64: 3, 128, 128>}, {pipeline_mode = #tpu.pipeline_mode<synchronous>, transform_indices = @transform_5, window_bounds = array<i64: 6, 128>}, {pipeline_mode = #tpu.pipeline_mode<synchronous>, transform_indices = @transform_6, window_bounds = array<i64: 2, 8, 128>}]} {
    %c0 = arith.constant 0 : index
    %c0_0 = arith.constant 0 : index
    %0 = vector.load %arg6[%c0, %c0_0] : memref<6x128xf32, #tpu.memory_space<vmem>>, vector<1x128xf32>
    %c1 = arith.constant 1 : index
    %c0_1 = arith.constant 0 : index
    %1 = vector.load %arg6[%c1, %c0_1] : memref<6x128xf32, #tpu.memory_space<vmem>>, vector<1x128xf32>
    %c2 = arith.constant 2 : index
    %c0_2 = arith.constant 0 : index
    %2 = vector.load %arg6[%c2, %c0_2] : memref<6x128xf32, #tpu.memory_space<vmem>>, vector<1x128xf32>
    %c3 = arith.constant 3 : index
    %c0_3 = arith.constant 0 : index
    %3 = vector.load %arg6[%c3, %c0_3] : memref<6x128xf32, #tpu.memory_space<vmem>>, vector<1x128xf32>
    %c4 = arith.constant 4 : index
    %c0_4 = arith.constant 0 : index
    %4 = vector.load %arg6[%c4, %c0_4] : memref<6x128xf32, #tpu.memory_space<vmem>>, vector<1x128xf32>
    %c5 = arith.constant 5 : index
    %c0_5 = arith.constant 0 : index
    %5 = vector.load %arg6[%c5, %c0_5] : memref<6x128xf32, #tpu.memory_space<vmem>>, vector<1x128xf32>
    %c0_6 = arith.constant 0 : index
    %c0_7 = arith.constant 0 : index
    %6 = vector.load %arg3[%c0_6, %c0_7] : memref<256x256xbf16, #tpu.memory_space<vmem>>, vector<256x256xbf16>
    %7 = arith.extf %6 : vector<256x256xbf16> to vector<256x256xf32>
    %c0_8 = arith.constant 0 : index
    %c0_9 = arith.constant 0 : index
    %8 = vector.load %arg1[%c0_8, %c0_9] : memref<20x256xf32, #tpu.memory_space<vmem>>, vector<20x256xf32>
    %cst = arith.constant dense<0.000000e+00> : vector<20x256xf32>
    %9 = tpu.matmul %8, %7, %cst {dimension_numbers = #tpu.dot_dimension_numbers<[1], [0], [0], [1], [0, 0, 1, 1], [], []>} : vector<20x256xf32>, vector<256x256xf32>, vector<20x256xf32> -> vector<20x256xf32>
    %10 = vector.extract_strided_slice %9 {offsets = [0, 0], sizes = [20, 128], strides = [1, 1]} : vector<20x256xf32> to vector<20x128xf32>
    %11 = vector.broadcast %0 : vector<1x128xf32> to vector<20x128xf32>
    %12 = arith.addf %10, %11 : vector<20x128xf32>
    %c0_10 = arith.constant 0 : index
    %c0_11 = arith.constant 0 : index
    %13 = vector.load %arg2[%c0_10, %c0_11] : memref<20x128xf32, #tpu.memory_space<vmem>>, vector<20x128xf32>
    %14 = arith.addf %12, %13 : vector<20x128xf32>
    %15 = vector.extract_strided_slice %9 {offsets = [0, 128], sizes = [20, 128], strides = [1, 1]} : vector<20x256xf32> to vector<20x128xf32>
    %16 = vector.broadcast %1 : vector<1x128xf32> to vector<20x128xf32>
    %17 = arith.addf %15, %16 : vector<20x128xf32>
    %18 = arith.negf %17 : vector<20x128xf32>
    %19 = math.exp %18 : vector<20x128xf32>
    %cst_12 = arith.constant 1.000000e+00 : f32
    %20 = vector.broadcast %cst_12 : f32 to vector<20x128xf32>
    %21 = arith.addf %20, %19 : vector<20x128xf32>
    %22 = arith.divf %20, %21 : vector<20x128xf32>
    %23 = arith.mulf %14, %22 : vector<20x128xf32>
    %c0_13 = arith.constant 0 : index
    %c0_14 = arith.constant 0 : index
    %24 = vector.load %arg4[%c0_13, %c0_14] : memref<128x128xbf16, #tpu.memory_space<vmem>>, vector<128x128xbf16>
    %25 = arith.extf %24 : vector<128x128xbf16> to vector<128x128xf32>
    %cst_15 = arith.constant dense<0.000000e+00> : vector<20x128xf32>
    %26 = tpu.matmul %23, %25, %cst_15 {dimension_numbers = #tpu.dot_dimension_numbers<[1], [0], [0], [1], [0, 0, 1, 1], [], []>} : vector<20x128xf32>, vector<128x128xf32>, vector<20x128xf32> -> vector<20x128xf32>
    %27 = vector.broadcast %2 : vector<1x128xf32> to vector<20x128xf32>
    %28 = arith.addf %26, %27 : vector<20x128xf32>
    %29 = arith.addf %28, %23 : vector<20x128xf32>
    %cst_16 = arith.constant 0.000000e+00 : f32
    %30 = vector.broadcast %cst_16 : f32 to vector<20x128xf32>
    %31 = arith.maximumf %29, %30 : vector<20x128xf32>
    %c0_17 = arith.constant 0 : index
    %c0_18 = arith.constant 0 : index
    %c0_19 = arith.constant 0 : index
    %32 = vector.load %arg5[%c0_17, %c0_18, %c0_19] : memref<3x128x128xbf16, #tpu.memory_space<vmem>>, vector<1x128x128xbf16>
    %33 = vector.shape_cast %32 : vector<1x128x128xbf16> to vector<128x128xbf16>
    %34 = arith.extf %33 : vector<128x128xbf16> to vector<128x128xf32>
    %c1_20 = arith.constant 1 : index
    %c0_21 = arith.constant 0 : index
    %c0_22 = arith.constant 0 : index
    %35 = vector.load %arg5[%c1_20, %c0_21, %c0_22] : memref<3x128x128xbf16, #tpu.memory_space<vmem>>, vector<1x128x128xbf16>
    %36 = vector.shape_cast %35 : vector<1x128x128xbf16> to vector<128x128xbf16>
    %37 = arith.extf %36 : vector<128x128xbf16> to vector<128x128xf32>
    %c2_23 = arith.constant 2 : index
    %c0_24 = arith.constant 0 : index
    %c0_25 = arith.constant 0 : index
    %38 = vector.load %arg5[%c2_23, %c0_24, %c0_25] : memref<3x128x128xbf16, #tpu.memory_space<vmem>>, vector<1x128x128xbf16>
    %39 = vector.shape_cast %38 : vector<1x128x128xbf16> to vector<128x128xbf16>
    %40 = arith.extf %39 : vector<128x128xbf16> to vector<128x128xf32>
    %41 = vector.extract_strided_slice %31 {offsets = [2, 0], sizes = [8, 128], strides = [1, 1]} : vector<20x128xf32> to vector<8x128xf32>
    %42 = vector.broadcast %3 : vector<1x128xf32> to vector<8x128xf32>
    %43 = arith.addf %42, %41 : vector<8x128xf32>
    %44 = vector.extract_strided_slice %31 {offsets = [0, 0], sizes = [8, 128], strides = [1, 1]} : vector<20x128xf32> to vector<8x128xf32>
    %cst_26 = arith.constant dense<0.000000e+00> : vector<8x128xf32>
    %45 = tpu.matmul %44, %34, %cst_26 {dimension_numbers = #tpu.dot_dimension_numbers<[1], [0], [0], [1], [0, 0, 1, 1], [], []>} : vector<8x128xf32>, vector<128x128xf32>, vector<8x128xf32> -> vector<8x128xf32>
    %46 = arith.addf %43, %45 : vector<8x128xf32>
    %47 = vector.extract_strided_slice %31 {offsets = [1, 0], sizes = [8, 128], strides = [1, 1]} : vector<20x128xf32> to vector<8x128xf32>
    %cst_27 = arith.constant dense<0.000000e+00> : vector<8x128xf32>
    %48 = tpu.matmul %47, %37, %cst_27 {dimension_numbers = #tpu.dot_dimension_numbers<[1], [0], [0], [1], [0, 0, 1, 1], [], []>} : vector<8x128xf32>, vector<128x128xf32>, vector<8x128xf32> -> vector<8x128xf32>
    %49 = arith.addf %46, %48 : vector<8x128xf32>
    %50 = vector.extract_strided_slice %31 {offsets = [2, 0], sizes = [8, 128], strides = [1, 1]} : vector<20x128xf32> to vector<8x128xf32>
    %cst_28 = arith.constant dense<0.000000e+00> : vector<8x128xf32>
    %51 = tpu.matmul %50, %40, %cst_28 {dimension_numbers = #tpu.dot_dimension_numbers<[1], [0], [0], [1], [0, 0, 1, 1], [], []>} : vector<8x128xf32>, vector<128x128xf32>, vector<8x128xf32> -> vector<8x128xf32>
    %52 = arith.addf %49, %51 : vector<8x128xf32>
    %cst_29 = arith.constant 0.000000e+00 : f32
    %53 = vector.broadcast %cst_29 : f32 to vector<8x128xf32>
    %54 = arith.maximumf %52, %53 : vector<8x128xf32>
    %cst_30 = arith.constant dense<0.000000e+00> : vector<8xf32>
    %55 = vector.multi_reduction <add>, %54, %cst_30 [1] : vector<8x128xf32> to vector<8xf32>
    %56 = vector.shape_cast %55 : vector<8xf32> to vector<8x1xf32>
    %cst_31 = arith.constant 1.280000e+02 : f32
    %57 = vector.broadcast %cst_31 : f32 to vector<8x1xf32>
    %58 = arith.divf %56, %57 : vector<8x1xf32>
    %59 = vector.broadcast %58 : vector<8x1xf32> to vector<8x128xf32>
    %60 = arith.subf %54, %59 : vector<8x128xf32>
    %61 = arith.mulf %60, %60 : vector<8x128xf32>
    %cst_32 = arith.constant dense<0.000000e+00> : vector<8xf32>
    %62 = vector.multi_reduction <add>, %61, %cst_32 [1] : vector<8x128xf32> to vector<8xf32>
    %63 = vector.shape_cast %62 : vector<8xf32> to vector<8x1xf32>
    %cst_33 = arith.constant 1.280000e+02 : f32
    %64 = vector.broadcast %cst_33 : f32 to vector<8x1xf32>
    %65 = arith.divf %63, %64 : vector<8x1xf32>
    %66 = vector.broadcast %58 : vector<8x1xf32> to vector<8x128xf32>
    %67 = arith.subf %54, %66 : vector<8x128xf32>
    %cst_34 = arith.constant 9.99999974E-6 : f32
    %68 = vector.broadcast %cst_34 : f32 to vector<8x1xf32>
    %69 = arith.addf %65, %68 : vector<8x1xf32>
    %70 = math.rsqrt %69 : vector<8x1xf32>
    %71 = vector.broadcast %70 : vector<8x1xf32> to vector<8x128xf32>
    %72 = arith.mulf %67, %71 : vector<8x128xf32>
    %73 = vector.broadcast %4 : vector<1x128xf32> to vector<8x128xf32>
    %74 = arith.mulf %72, %73 : vector<8x128xf32>
    %75 = vector.broadcast %5 : vector<1x128xf32> to vector<8x128xf32>
    %76 = arith.addf %74, %75 : vector<8x128xf32>
    %c0_35 = arith.constant 0 : index
    %c0_36 = arith.constant 0 : index
    %c0_37 = arith.constant 0 : index
    %77 = vector.load %arg7[%c0_35, %c0_36, %c0_37] : memref<2x8x128xf32, #tpu.memory_space<vmem>>, vector<1x8x128xf32>
    %78 = vector.shape_cast %77 : vector<1x8x128xf32> to vector<8x128xf32>
    %79 = vector.shape_cast %76 : vector<8x128xf32> to vector<1x8x128xf32>
    tpu.vector_store %arg7[%c0_35, %c0_36, %c0_37], %79 {strides = array<i32>} : memref<2x8x128xf32, #tpu.memory_space<vmem>>, vector<1x8x128xf32>,
    %80 = vector.extract_strided_slice %31 {offsets = [12, 0], sizes = [8, 128], strides = [1, 1]} : vector<20x128xf32> to vector<8x128xf32>
    %81 = vector.broadcast %3 : vector<1x128xf32> to vector<8x128xf32>
    %82 = arith.addf %81, %80 : vector<8x128xf32>
    %83 = vector.extract_strided_slice %31 {offsets = [10, 0], sizes = [8, 128], strides = [1, 1]} : vector<20x128xf32> to vector<8x128xf32>
    %cst_38 = arith.constant dense<0.000000e+00> : vector<8x128xf32>
    %84 = tpu.matmul %83, %34, %cst_38 {dimension_numbers = #tpu.dot_dimension_numbers<[1], [0], [0], [1], [0, 0, 1, 1], [], []>} : vector<8x128xf32>, vector<128x128xf32>, vector<8x128xf32> -> vector<8x128xf32>
    %85 = arith.addf %82, %84 : vector<8x128xf32>
    %86 = vector.extract_strided_slice %31 {offsets = [11, 0], sizes = [8, 128], strides = [1, 1]} : vector<20x128xf32> to vector<8x128xf32>
    %cst_39 = arith.constant dense<0.000000e+00> : vector<8x128xf32>
    %87 = tpu.matmul %86, %37, %cst_39 {dimension_numbers = #tpu.dot_dimension_numbers<[1], [0], [0], [1], [0, 0, 1, 1], [], []>} : vector<8x128xf32>, vector<128x128xf32>, vector<8x128xf32> -> vector<8x128xf32>
    %88 = arith.addf %85, %87 : vector<8x128xf32>
    %89 = vector.extract_strided_slice %31 {offsets = [12, 0], sizes = [8, 128], strides = [1, 1]} : vector<20x128xf32> to vector<8x128xf32>
    %cst_40 = arith.constant dense<0.000000e+00> : vector<8x128xf32>
    %90 = tpu.matmul %89, %40, %cst_40 {dimension_numbers = #tpu.dot_dimension_numbers<[1], [0], [0], [1], [0, 0, 1, 1], [], []>} : vector<8x128xf32>, vector<128x128xf32>, vector<8x128xf32> -> vector<8x128xf32>
    %91 = arith.addf %88, %90 : vector<8x128xf32>
    %cst_41 = arith.constant 0.000000e+00 : f32
    %92 = vector.broadcast %cst_41 : f32 to vector<8x128xf32>
    %93 = arith.maximumf %91, %92 : vector<8x128xf32>
    %cst_42 = arith.constant dense<0.000000e+00> : vector<8xf32>
    %94 = vector.multi_reduction <add>, %93, %cst_42 [1] : vector<8x128xf32> to vector<8xf32>
    %95 = vector.shape_cast %94 : vector<8xf32> to vector<8x1xf32>
    %cst_43 = arith.constant 1.280000e+02 : f32
    %96 = vector.broadcast %cst_43 : f32 to vector<8x1xf32>
    %97 = arith.divf %95, %96 : vector<8x1xf32>
    %98 = vector.broadcast %97 : vector<8x1xf32> to vector<8x128xf32>
    %99 = arith.subf %93, %98 : vector<8x128xf32>
    %100 = arith.mulf %99, %99 : vector<8x128xf32>
    %cst_44 = arith.constant dense<0.000000e+00> : vector<8xf32>
    %101 = vector.multi_reduction <add>, %100, %cst_44 [1] : vector<8x128xf32> to vector<8xf32>
    %102 = vector.shape_cast %101 : vector<8xf32> to vector<8x1xf32>
    %cst_45 = arith.constant 1.280000e+02 : f32
    %103 = vector.broadcast %cst_45 : f32 to vector<8x1xf32>
    %104 = arith.divf %102, %103 : vector<8x1xf32>
    %105 = vector.broadcast %97 : vector<8x1xf32> to vector<8x128xf32>
    %106 = arith.subf %93, %105 : vector<8x128xf32>
    %cst_46 = arith.constant 9.99999974E-6 : f32
    %107 = vector.broadcast %cst_46 : f32 to vector<8x1xf32>
    %108 = arith.addf %104, %107 : vector<8x1xf32>
    %109 = math.rsqrt %108 : vector<8x1xf32>
    %110 = vector.broadcast %109 : vector<8x1xf32> to vector<8x128xf32>
    %111 = arith.mulf %106, %110 : vector<8x128xf32>
    %112 = vector.broadcast %4 : vector<1x128xf32> to vector<8x128xf32>
    %113 = arith.mulf %111, %112 : vector<8x128xf32>
    %114 = vector.broadcast %5 : vector<1x128xf32> to vector<8x128xf32>
    %115 = arith.addf %113, %114 : vector<8x128xf32>
    %c1_47 = arith.constant 1 : index
    %c0_48 = arith.constant 0 : index
    %c0_49 = arith.constant 0 : index
    %116 = vector.load %arg7[%c1_47, %c0_48, %c0_49] : memref<2x8x128xf32, #tpu.memory_space<vmem>>, vector<1x8x128xf32>
    %117 = vector.shape_cast %116 : vector<1x8x128xf32> to vector<8x128xf32>
    %118 = vector.shape_cast %115 : vector<8x128xf32> to vector<1x8x128xf32>
    tpu.vector_store %arg7[%c1_47, %c0_48, %c0_49], %118 {strides = array<i32>} : memref<2x8x128xf32, #tpu.memory_space<vmem>>, vector<1x8x128xf32>,
    return
  }
  func.func @transform_0(%arg0: i32) -> (i32, i32) {
    %c0_i32 = arith.constant 0 : i32
    %c0_i32_0 = arith.constant 0 : i32
    %c0_i32_1 = arith.constant 0 : i32
    return %c0_i32, %c0_i32_0 : i32, i32
  }
  func.func @transform_1(%arg0: i32) -> (i32, i32) {
    %c0_i32 = arith.constant 0 : i32
    %c0_i32_0 = arith.constant 0 : i32
    %c0_i32_1 = arith.constant 0 : i32
    return %c0_i32, %c0_i32_0 : i32, i32
  }
  func.func @transform_2(%arg0: i32) -> (i32, i32) {
    %c0_i32 = arith.constant 0 : i32
    %c0_i32_0 = arith.constant 0 : i32
    %c0_i32_1 = arith.constant 0 : i32
    return %c0_i32, %c0_i32_0 : i32, i32
  }
  func.func @transform_3(%arg0: i32) -> (i32, i32) {
    %c0_i32 = arith.constant 0 : i32
    %c0_i32_0 = arith.constant 0 : i32
    %c0_i32_1 = arith.constant 0 : i32
    return %c0_i32, %c0_i32_0 : i32, i32
  }
  func.func @transform_4(%arg0: i32) -> (i32, i32, i32) {
    %c0_i32 = arith.constant 0 : i32
    %c0_i32_0 = arith.constant 0 : i32
    %c0_i32_1 = arith.constant 0 : i32
    %c0_i32_2 = arith.constant 0 : i32
    return %c0_i32, %c0_i32_0, %c0_i32_1 : i32, i32, i32
  }
  func.func @transform_5(%arg0: i32) -> (i32, i32) {
    %c0_i32 = arith.constant 0 : i32
    %c0_i32_0 = arith.constant 0 : i32
    %c0_i32_1 = arith.constant 0 : i32
    return %c0_i32, %c0_i32_0 : i32, i32
  }
  func.func @transform_6(%arg0: i32) -> (i32, i32, i32) {
    %c0_i32 = arith.constant 0 : i32
    %c0_i32_0 = arith.constant 0 : i32
    %c0_i32_1 = arith.constant 0 : i32
    %c0_i32_2 = arith.constant 0 : i32
    return %c0_i32, %c0_i32_0, %c0_i32_1 : i32, i32, i32
  }
}

</mosaic_0001>

<llo_original>
// kernel: tpu_custom_call.1
$region0: #{tpu_custom_call.1}
  #allocation0 [shape = 'u32[]', space=smem, size = 0x4, offset = 0x4, fixed_abs, tag = 'smem constant byte address 0x4 - core index']
  #allocation1 [shape = 'u32[72,128]{1,0:T(1,128)}', space=vmem, size = 0x9000, scoped, tag = 'internal scratch']
  %s0 = inlined_call_operand.hbm [shape: f32[20,256], index: 0, kind: input, shape index: {}]
  %s1 = inlined_call_operand.hbm [shape: f32[20,128], index: 1, kind: input, shape index: {}]
  %s2 = inlined_call_operand.hbm [shape: bf16[256,256], index: 2, kind: input, shape index: {}]
  %s3 = inlined_call_operand.hbm [shape: bf16[128,128], index: 3, kind: input, shape index: {}]
  %s4 = inlined_call_operand.hbm [shape: bf16[3,128,128], index: 4, kind: input, shape index: {}]
  %s5 = inlined_call_operand.hbm [shape: f32[6,128], index: 5, kind: input, shape index: {}]
  %s6 = inlined_call_operand.hbm [shape: f32[2,8,128], index: 6, kind: output, shape index: {}]
  %s7 = sld [smem:[#allocation0]]
  $region58: #{tpu_custom_call.1} parent=0
    _
  %s9 = ssub.s32 1, %s7
  %s10 = scalar_select 0, %s9, %s7
  $region1: #{tpu_custom_call.1} parent=0
    #allocation2 [shape = 'u8[24576]{0}', space=vmem, size = 0x6000, scoped, tag = 'input window, operand 0, single buffered']
    #allocation3 [shape = 's32[1]{0}', space=sflag, size = 0x4, scoped, tag = 'scoped memory for tpu_custom_call.1']
    #allocation4 [shape = 's32[1]{0}', space=sflag, size = 0x4, scoped, tag = 'scoped memory for tpu_custom_call.1']
    #allocation5 [shape = 'u8[12288]{0}', space=vmem, size = 0x3000, scoped, tag = 'input window, operand 1, single buffered']
    #allocation6 [shape = 's32[1]{0}', space=sflag, size = 0x4, scoped, tag = 'scoped memory for tpu_custom_call.1']
    #allocation7 [shape = 'u8[131072]{0}', space=vmem, size = 0x20000, scoped, tag = 'input window, operand 2, single buffered']
    #allocation8 [shape = 'u8[32768]{0}', space=vmem, size = 0x8000, scoped, tag = 'input window, operand 3, single buffered']
    #allocation9 [shape = 's32[1]{0}', space=sflag, size = 0x4, scoped, tag = 'scoped memory for tpu_custom_call.1']
    #allocation10 [shape = 'u8[98304]{0}', space=vmem, size = 0x18000, scoped, tag = 'input window, operand 4, single buffered']
    #allocation11 [shape = 'u8[4096]{0}', space=vmem, size = 0x1000, scoped, tag = 'input window, operand 5, single buffered']
    #allocation12 [shape = 's32[1]{0}', space=sflag, size = 0x4, scoped, tag = 'scoped memory for tpu_custom_call.1']
    #allocation13 [shape = 'u8[8192]{0}', space=vmem, size = 0x2000, scoped, tag = 'output window, operand 0, single buffered']
    %11 = vsyncpa [#allocation3], 0
    %12 = vsyncpa [#allocation6], 0
    %13 = vsyncpa [#allocation9], 0
    %14 = vsyncpa [#allocation12], 0
    %15 = vsyncpa [#allocation4], 0
    // Predicated region
    $region2: #{tpu_custom_call.1} parent=1 // pred_check
      _
    $region3: #{tpu_custom_call.1} parent=1 // pred_check_branch
      %17 = sbr.rel (0) target = $region5
    $region4: #{tpu_custom_call.1} parent=1 // pred_region
      %19 = vsyncadd [#allocation3], 0
      %s20 = sshll.u32 %s0, 4
      %s21 = int_to_ptr.hbm [resolvable:$true] %s20
      %s22 = sshll.u32 [#allocation2], 4
      %s23 = int_to_ptr.vmem [resolvable:$true] %s22
      %28 = dma.hbm_to_vmem [thread:$0]  %s21, 768, %s23, [#allocation3], 256, 256, 16
    $region5: #{tpu_custom_call.1} parent=1 // pred_fallthru
      _
    // Predicated region
    $region6: #{tpu_custom_call.1} parent=1 // pred_check
      _
    $region7: #{tpu_custom_call.1} parent=1 // pred_check_branch
      %30 = sbr.rel (0) target = $region9
    $region8: #{tpu_custom_call.1} parent=1 // pred_region
      %32 = vsyncadd [#allocation6], 0
      %s33 = sshll.u32 %s1, 4
      %s34 = int_to_ptr.hbm [resolvable:$true] %s33
      %s35 = sshll.u32 [#allocation5], 4
      %s36 = int_to_ptr.vmem [resolvable:$true] %s35
      %41 = dma.hbm_to_vmem [thread:$0]  %s34, 384, %s36, [#allocation6], 128, 128, 8
    $region9: #{tpu_custom_call.1} parent=1 // pred_fallthru
      _
    // Predicated region
    $region10: #{tpu_custom_call.1} parent=1 // pred_check
      _
    $region11: #{tpu_custom_call.1} parent=1 // pred_check_branch
      %43 = sbr.rel (0) target = $region13
    $region12: #{tpu_custom_call.1} parent=1 // pred_region
      %45 = vsyncadd [#allocation6], 0
      %s46 = sshll.u32 %s2, 4
      %s47 = int_to_ptr.hbm [resolvable:$true] %s46
      %s48 = sshll.u32 [#allocation7], 4
      %s49 = int_to_ptr.vmem [resolvable:$true] %s48
      %54 = dma.hbm_to_vmem [thread:$0]  %s47, 4096, %s49, [#allocation6], 128, 128, 8
    $region13: #{tpu_custom_call.1} parent=1 // pred_fallthru
      _
    // Predicated region
    $region14: #{tpu_custom_call.1} parent=1 // pred_check
      _
    $region15: #{tpu_custom_call.1} parent=1 // pred_check_branch
      %56 = sbr.rel (0) target = $region17
    $region16: #{tpu_custom_call.1} parent=1 // pred_region
      %58 = vsyncadd [#allocation9], 0
      %s59 = sshll.u32 %s3, 4
      %s60 = int_to_ptr.hbm [resolvable:$true] %s59
      %s61 = sshll.u32 [#allocation8], 4
      %s62 = int_to_ptr.vmem [resolvable:$true] %s61
      %67 = dma.hbm_to_vmem [thread:$0]  %s60, 1024, %s62, [#allocation9], 64, 64, 4
    $region17: #{tpu_custom_call.1} parent=1 // pred_fallthru
      _
    // Predicated region
    $region18: #{tpu_custom_call.1} parent=1 // pred_check
      _
    $region19: #{tpu_custom_call.1} parent=1 // pred_check_branch
      %69 = sbr.rel (0) target = $region21
    $region20: #{tpu_custom_call.1} parent=1 // pred_region
      %71 = vsyncadd [#allocation9], 0
      %s72 = sshll.u32 %s4, 4
      %s73 = int_to_ptr.hbm [resolvable:$true] %s72
      %s74 = sshll.u32 [#allocation10], 4
      %s75 = int_to_ptr.vmem [resolvable:$true] %s74
      %80 = dma.hbm_to_vmem [thread:$0]  %s73, 3072, %s75, [#allocation9], 64, 64, 4
    $region21: #{tpu_custom_call.1} parent=1 // pred_fallthru
      _
    // Predicated region
    $region22: #{tpu_custom_call.1} parent=1 // pred_check
      _
    $region23: #{tpu_custom_call.1} parent=1 // pred_check_branch
      %82 = sbr.rel (0) target = $region25
    $region24: #{tpu_custom_call.1} parent=1 // pred_region
      %84 = vsyncadd [#allocation12], 0
      %s86 = sshll.u32 %s5, 4
      %s87 = int_to_ptr.hbm [resolvable:$true] %s86
      %s88 = sshll.u32 [#allocation11], 4
      %s89 = int_to_ptr.vmem [resolvable:$true] %s88
      %91 = dma.hbm_to_vmem [thread:$0]  %s87, 128, %s89, [#allocation12]
    $region25: #{tpu_custom_call.1} parent=1 // pred_fallthru
      _
    // Predicated region
    $region26: #{tpu_custom_call.1} parent=1 // pred_check
      _
    $region27: #{tpu_custom_call.1} parent=1 // pred_check_branch
      %93 = sbr.rel (0) target = $region29
    $region28: #{tpu_custom_call.1} parent=1 // pred_region
      %95 = dma.done [#allocation3], 768
    $region29: #{tpu_custom_call.1} parent=1 // pred_fallthru
      _
    // Predicated region
    $region30: #{tpu_custom_call.1} parent=1 // pred_check
      _
    $region31: #{tpu_custom_call.1} parent=1 // pred_check_branch
      %97 = sbr.rel (0) target = $region33
    $region32: #{tpu_custom_call.1} parent=1 // pred_region
      %99 = dma.done [#allocation6], 384
    $region33: #{tpu_custom_call.1} parent=1 // pred_fallthru
      _
    // Predicated region
    $region34: #{tpu_custom_call.1} parent=1 // pred_check
      _
    $region35: #{tpu_custom_call.1} parent=1 // pred_check_branch
      %101 = sbr.rel (0) target = $region37
    $region36: #{tpu_custom_call.1} parent=1 // pred_region
      %103 = dma.done [#allocation6], 4096
    $region37: #{tpu_custom_call.1} parent=1 // pred_fallthru
      _
    // Predicated region
    $region38: #{tpu_custom_call.1} parent=1 // pred_check
      _
    $region39: #{tpu_custom_call.1} parent=1 // pred_check_branch
      %105 = sbr.rel (0) target = $region41
    $region40: #{tpu_custom_call.1} parent=1 // pred_region
      %107 = dma.done [#allocation9], 1024
    $region41: #{tpu_custom_call.1} parent=1 // pred_fallthru
      _
    // Predicated region
    $region42: #{tpu_custom_call.1} parent=1 // pred_check
      _
    $region43: #{tpu_custom_call.1} parent=1 // pred_check_branch
      %109 = sbr.rel (0) target = $region45
    $region44: #{tpu_custom_call.1} parent=1 // pred_region
      %111 = dma.done [#allocation9], 3072
    $region45: #{tpu_custom_call.1} parent=1 // pred_fallthru
      _
    // Predicated region
    $region46: #{tpu_custom_call.1} parent=1 // pred_check
      _
    $region47: #{tpu_custom_call.1} parent=1 // pred_check_branch
      %113 = sbr.rel (0) target = $region49
    $region48: #{tpu_custom_call.1} parent=1 // pred_region
      %115 = dma.done [#allocation12], 128
    $region49: #{tpu_custom_call.1} parent=1 // pred_fallthru
      _
    %v116 = vld [vmem:[#allocation11] sm:$0x1]
    %v117 = vld [vmem:[#allocation11 + $0x1] sm:$0x1]
    %v118 = vld [vmem:[#allocation11 + $0x2] sm:$0x1]
    %v119 = vld [vmem:[#allocation11 + $0x3] sm:$0x1]
    %v120 = vld [vmem:[#allocation11 + $0x4] sm:$0x1]
    %v121 = vld [vmem:[#allocation11 + $0x5] sm:$0x1]
    %v122 = vld [vmem:[#allocation7] sm:$0xff]
    %v123 = vld [vmem:[#allocation7 + $0x8] sm:$0xff]
    %v124 = vld [vmem:[#allocation7 + $0x10] sm:$0xff]
    %v125 = vld [vmem:[#allocation7 + $0x18] sm:$0xff]
    %v126 = vld [vmem:[#allocation7 + $0x20] sm:$0xff]
    %v127 = vld [vmem:[#allocation7 + $0x28] sm:$0xff]
    %v128 = vld [vmem:[#allocation7 + $0x30] sm:$0xff]
    %v129 = vld [vmem:[#allocation7 + $0x38] sm:$0xff]
    %v130 = vld [vmem:[#allocation7 + $0x40] sm:$0xff]
    %v131 = vld [vmem:[#allocation7 + $0x48] sm:$0xff]
    %v132 = vld [vmem:[#allocation7 + $0x50] sm:$0xff]
    %v133 = vld [vmem:[#allocation7 + $0x58] sm:$0xff]
    %v134 = vld [vmem:[#allocation7 + $0x60] sm:$0xff]
    %v135 = vld [vmem:[#allocation7 + $0x68] sm:$0xff]
    %v136 = vld [vmem:[#allocation7 + $0x70] sm:$0xff]
    %v137 = vld [vmem:[#allocation7 + $0x78] sm:$0xff]
    %v138 = vld [vmem:[#allocation7 + $0x80] sm:$0xff]
    %v139 = vld [vmem:[#allocation7 + $0x88] sm:$0xff]
    %v140 = vld [vmem:[#allocation7 + $0x90] sm:$0xff]
    %v141 = vld [vmem:[#allocation7 + $0x98] sm:$0xff]
    %v142 = vld [vmem:[#allocation7 + $0xa0] sm:$0xff]
    %v143 = vld [vmem:[#allocation7 + $0xa8] sm:$0xff]
    %v144 = vld [vmem:[#allocation7 + $0xb0] sm:$0xff]
    %v145 = vld [vmem:[#allocation7 + $0xb8] sm:$0xff]
    %v146 = vld [vmem:[#allocation7 + $0xc0] sm:$0xff]
    %v147 = vld [vmem:[#allocation7 + $0xc8] sm:$0xff]
    %v148 = vld [vmem:[#allocation7 + $0xd0] sm:$0xff]
    %v149 = vld [vmem:[#allocation7 + $0xd8] sm:$0xff]
    %v150 = vld [vmem:[#allocation7 + $0xe0] sm:$0xff]
    %v151 = vld [vmem:[#allocation7 + $0xe8] sm:$0xff]
    %v152 = vld [vmem:[#allocation7 + $0xf0] sm:$0xff]
    %v153 = vld [vmem:[#allocation7 + $0xf8] sm:$0xff]
    %v154 = vunpack.c.l.bf16 %v122
    %v155 = vunpack.c.h.bf16 %v122
    %v156 = vunpack.c.l.bf16 %v123
    %v157 = vunpack.c.h.bf16 %v123
    %v158 = vunpack.c.l.bf16 %v124
    %v159 = vunpack.c.h.bf16 %v124
    %v160 = vunpack.c.l.bf16 %v125
    %v161 = vunpack.c.h.bf16 %v125
    %v162 = vunpack.c.l.bf16 %v126
    %v163 = vunpack.c.h.bf16 %v126
    %v164 = vunpack.c.l.bf16 %v127
    %v165 = vunpack.c.h.bf16 %v127
    %v166 = vunpack.c.l.bf16 %v128
    %v167 = vunpack.c.h.bf16 %v128
    %v168 = vunpack.c.l.bf16 %v129
    %v169 = vunpack.c.h.bf16 %v129
    %v170 = vunpack.c.l.bf16 %v130
    %v171 = vunpack.c.h.bf16 %v130
    %v172 = vunpack.c.l.bf16 %v131
    %v173 = vunpack.c.h.bf16 %v131
    %v174 = vunpack.c.l.bf16 %v132
    %v175 = vunpack.c.h.bf16 %v132
    %v176 = vunpack.c.l.bf16 %v133
    %v177 = vunpack.c.h.bf16 %v133
    %v178 = vunpack.c.l.bf16 %v134
    %v179 = vunpack.c.h.bf16 %v134
    %v180 = vunpack.c.l.bf16 %v135
    %v181 = vunpack.c.h.bf16 %v135
    %v182 = vunpack.c.l.bf16 %v136
    %v183 = vunpack.c.h.bf16 %v136
    %v184 = vunpack.c.l.bf16 %v137
    %v185 = vunpack.c.h.bf16 %v137
    %v186 = vunpack.c.l.bf16 %v138
    %v187 = vunpack.c.h.bf16 %v138
    %v188 = vunpack.c.l.bf16 %v139
    %v189 = vunpack.c.h.bf16 %v139
    %v190 = vunpack.c.l.bf16 %v140
    %v191 = vunpack.c.h.bf16 %v140
    %v192 = vunpack.c.l.bf16 %v141
    %v193 = vunpack.c.h.bf16 %v141
    %v194 = vunpack.c.l.bf16 %v142
    %v195 = vunpack.c.h.bf16 %v142
    %v196 = vunpack.c.l.bf16 %v143
    %v197 = vunpack.c.h.bf16 %v143
    %v198 = vunpack.c.l.bf16 %v144
    %v199 = vunpack.c.h.bf16 %v144
    %v200 = vunpack.c.l.bf16 %v145
    %v201 = vunpack.c.h.bf16 %v145
    %v202 = vunpack.c.l.bf16 %v146
    %v203 = vunpack.c.h.bf16 %v146
    %v204 = vunpack.c.l.bf16 %v147
    %v205 = vunpack.c.h.bf16 %v147
    %v206 = vunpack.c.l.bf16 %v148
    %v207 = vunpack.c.h.bf16 %v148
    %v208 = vunpack.c.l.bf16 %v149
    %v209 = vunpack.c.h.bf16 %v149
    %v210 = vunpack.c.l.bf16 %v150
    %v211 = vunpack.c.h.bf16 %v150
    %v212 = vunpack.c.l.bf16 %v151
    %v213 = vunpack.c.h.bf16 %v151
    %v214 = vunpack.c.l.bf16 %v152
    %v215 = vunpack.c.h.bf16 %v152
    %v216 = vunpack.c.l.bf16 %v153
    %v217 = vunpack.c.h.bf16 %v153
    %v218 = vld [vmem:[#allocation2] sm:$0xff]
    %v219 = vld [vmem:[#allocation2 + $0x8] sm:$0xff]
    %v220 = vld [vmem:[#allocation2 + $0x10] sm:$0xff]
    %v221 = vld [vmem:[#allocation2 + $0x18] sm:$0xff]
    %v222 = vld [vmem:[#allocation2 + $0x20] sm:$0xf]
    %v223 = vld [vmem:[#allocation2 + $0x28] sm:$0xf]
    %224 = vmatpush.msra.mxu0 %v184
    %225 = vmatpush.msra.mxu0 %v182
    %226 = vmatpush.msra.mxu0 %v180
    %227 = vmatpush.msra.mxu0 %v178
    %228 = vmatpush.msra.mxu0 %v176
    %229 = vmatpush.msra.mxu0 %v174
    %230 = vmatpush.msra.mxu0 %v172
    %231 = vmatpush.msra.mxu0 %v170
    %232 = vmatpush.msra.mxu0 %v168
    %233 = vmatpush.msra.mxu0 %v166
    %234 = vmatpush.msra.mxu0 %v164
    %235 = vmatpush.msra.mxu0 %v162
    %236 = vmatpush.msra.mxu0 %v160
    %237 = vmatpush.msra.mxu0 %v158
    %238 = vmatpush.msra.mxu0 %v156
    %239 = vmatpush.msra.mxu0 %v154
    %240 = vmatmul.f32.gmra.mxu0 %v218
    %v241 = vpop.f32.mrf.mxu0
    %v242 = vadd.f32 0.0, %v241
    %243 = vmatmul.f32.gmra.mxu0 %v220
    %v244 = vpop.f32.mrf.mxu0
    %v245 = vadd.f32 0.0, %v244
    %246 = vmatmul.f32.gmra.mxu0 %v222
    %v247 = vpop.f32.mrf.mxu0
    %v248 = vadd.f32 0.0, %v247
    %249 = vdwg.mxu0
    %250 = vmatpush.msra.mxu0 %v216
    %251 = vmatpush.msra.mxu0 %v214
    %252 = vmatpush.msra.mxu0 %v212
    %253 = vmatpush.msra.mxu0 %v210
    %254 = vmatpush.msra.mxu0 %v208
    %255 = vmatpush.msra.mxu0 %v206
    %256 = vmatpush.msra.mxu0 %v204
    %257 = vmatpush.msra.mxu0 %v202
    %258 = vmatpush.msra.mxu0 %v200
    %259 = vmatpush.msra.mxu0 %v198
    %260 = vmatpush.msra.mxu0 %v196
    %261 = vmatpush.msra.mxu0 %v194
    %262 = vmatpush.msra.mxu0 %v192
    %263 = vmatpush.msra.mxu0 %v190
    %264 = vmatpush.msra.mxu0 %v188
    %265 = vmatpush.msra.mxu0 %v186
    %266 = vmatmul.f32.gmra.mxu0 %v219
    %v267 = vpop.f32.mrf.mxu0
    %v268 = vadd.f32 %v242, %v267
    %269 = vmatmul.f32.gmra.mxu0 %v221
    %v270 = vpop.f32.mrf.mxu0
    %v271 = vadd.f32 %v245, %v270
    %272 = vmatmul.f32.gmra.mxu0 %v223
    %v273 = vpop.f32.mrf.mxu0
    %v274 = vadd.f32 %v248, %v273
    %275 = vdwg.mxu0
    %276 = vmatpush.msra.mxu0 %v185
    %277 = vmatpush.msra.mxu0 %v183
    %278 = vmatpush.msra.mxu0 %v181
    %279 = vmatpush.msra.mxu0 %v179
    %280 = vmatpush.msra.mxu0 %v177
    %281 = vmatpush.msra.mxu0 %v175
    %282 = vmatpush.msra.mxu0 %v173
    %283 = vmatpush.msra.mxu0 %v171
    %284 = vmatpush.msra.mxu0 %v169
    %285 = vmatpush.msra.mxu0 %v167
    %286 = vmatpush.msra.mxu0 %v165
    %287 = vmatpush.msra.mxu0 %v163
    %288 = vmatpush.msra.mxu0 %v161
    %289 = vmatpush.msra.mxu0 %v159
    %290 = vmatpush.msra.mxu0 %v157
    %291 = vmatpush.msra.mxu0 %v155
    %292 = vmatmul.f32.gmra.mxu0 %v218
    %v293 = vpop.f32.mrf.mxu0
    %v294 = vadd.f32 0.0, %v293
    %295 = vmatmul.f32.gmra.mxu0 %v220
    %v296 = vpop.f32.mrf.mxu0
    %v297 = vadd.f32 0.0, %v296
    %298 = vmatmul.f32.gmra.mxu0 %v222
    %v299 = vpop.f32.mrf.mxu0
    %v300 = vadd.f32 0.0, %v299
    %301 = vdwg.mxu0
    %302 = vmatpush.msra.mxu0 %v217
    %303 = vmatpush.msra.mxu0 %v215
    %304 = vmatpush.msra.mxu0 %v213
    %305 = vmatpush.msra.mxu0 %v211
    %306 = vmatpush.msra.mxu0 %v209
    %307 = vmatpush.msra.mxu0 %v207
    %308 = vmatpush.msra.mxu0 %v205
    %309 = vmatpush.msra.mxu0 %v203
    %310 = vmatpush.msra.mxu0 %v201
    %311 = vmatpush.msra.mxu0 %v199
    %312 = vmatpush.msra.mxu0 %v197
    %313 = vmatpush.msra.mxu0 %v195
    %314 = vmatpush.msra.mxu0 %v193
    %315 = vmatpush.msra.mxu0 %v191
    %316 = vmatpush.msra.mxu0 %v189
    %317 = vmatpush.msra.mxu0 %v187
    %318 = vmatmul.f32.gmra.mxu0 %v219
    %v319 = vpop.f32.mrf.mxu0
    %v320 = vadd.f32 %v294, %v319
    %321 = vmatmul.f32.gmra.mxu0 %v221
    %v322 = vpop.f32.mrf.mxu0
    %v323 = vadd.f32 %v297, %v322
    %324 = vmatmul.f32.gmra.mxu0 %v223
    %v325 = vpop.f32.mrf.mxu0
    %v326 = vadd.f32 %v300, %v325
    %327 = vdwg.mxu0
    %v328 = vperm.slane %v116, 0
    %v329 = vadd.f32 %v268, %v328
    %v330 = vadd.f32 %v271, %v328
    %v331 = vadd.f32 %v274, %v328
    %v332 = vld [vmem:[#allocation5] sm:$0xff]
    %v333 = vld [vmem:[#allocation5 + $0x8] sm:$0xff]
    %v334 = vld [vmem:[#allocation5 + $0x10] sm:$0xf]
    %v335 = vadd.f32 %v329, %v332
    %v336 = vadd.f32 %v330, %v333
    %v337 = vadd.f32 %v331, %v334
    %v338 = vperm.slane %v117, 0
    %v339 = vadd.f32 %v320, %v338
    %v340 = vadd.f32 %v323, %v338
    %v341 = vadd.f32 %v326, %v338
    %v342 = vxor.u32 %v339, 2147483648
    %v343 = vxor.u32 %v340, 2147483648
    %v344 = vxor.u32 %v341, 2147483648
    %v345 = vmul.f32 %v342, 1.442695
    %v346 = vpow.pop %v345
    %v347 = vmul.f32 %v343, 1.442695
    %v348 = vpow.pop %v347
    %v349 = vmul.f32 %v344, 1.442695
    %v350 = vpow.pop %v349
    %v351 = vadd.f32 %v346, 1.0
    %v352 = vadd.f32 %v348, 1.0
    %v353 = vadd.f32 %v350, 1.0
    %v354 = vrcp.pop %v351
    %v355 = vmul.f32 %v351, %v354
    %v356 = vsub.f32 1.0, %v355
    %v357 = vmul.f32 %v354, %v356
    %v358 = vadd.f32 %v354, %v357
    %vm359 = vweird.f32 %v351
    %vm360 = vweird.f32 %v354
    %vm361 = vmor %vm359, %vm360
    %v362 = vsel %vm361, %v354, %v358
    %v363 = vand.u32 2147483647, %v351
    %vm364 = vcmp.eq.f32.partialorder %v363, 8.507059e+37
    %v365 = vand.u32 %v351, 2147483648
    %v366 = vor.u32 1.1754944e-38, %v365
    %v367 = vsel %vm364, %v366, %v362
    %v368 = vmul.f32 1.0, %v367
    %v369 = vrcp.pop %v352
    %v370 = vmul.f32 %v352, %v369
    %v371 = vsub.f32 1.0, %v370
    %v372 = vmul.f32 %v369, %v371
    %v373 = vadd.f32 %v369, %v372
    %vm374 = vweird.f32 %v352
    %vm375 = vweird.f32 %v369
    %vm376 = vmor %vm374, %vm375
    %v377 = vsel %vm376, %v369, %v373
    %v378 = vand.u32 2147483647, %v352
    %vm379 = vcmp.eq.f32.partialorder %v378, 8.507059e+37
    %v380 = vand.u32 %v352, 2147483648
    %v381 = vor.u32 1.1754944e-38, %v380
    %v382 = vsel %vm379, %v381, %v377
    %v383 = vmul.f32 1.0, %v382
    %v384 = vrcp.pop %v353
    %v385 = vmul.f32 %v353, %v384
    %v386 = vsub.f32 1.0, %v385
    %v387 = vmul.f32 %v384, %v386
    %v388 = vadd.f32 %v384, %v387
    %vm389 = vweird.f32 %v353
    %vm390 = vweird.f32 %v384
    %vm391 = vmor %vm389, %vm390
    %v392 = vsel %vm391, %v384, %v388
    %v393 = vand.u32 2147483647, %v353
    %vm394 = vcmp.eq.f32.partialorder %v393, 8.507059e+37
    %v395 = vand.u32 %v353, 2147483648
    %v396 = vor.u32 1.1754944e-38, %v395
    %v397 = vsel %vm394, %v396, %v392
    %v398 = vmul.f32 1.0, %v397
    %v399 = vmul.f32 %v335, %v368
    %v400 = vmul.f32 %v336, %v383
    %v401 = vmul.f32 %v337, %v398
    %v402 = vld [vmem:[#allocation8] sm:$0xf]
    %v403 = vld [vmem:[#allocation8 + $0x4] sm:$0xf]
    %v404 = vld [vmem:[#allocation8 + $0x8] sm:$0xf]
    %v405 = vld [vmem:[#allocation8 + $0xc] sm:$0xf]
    %v406 = vld [vmem:[#allocation8 + $0x10] sm:$0xf]
    %v407 = vld [vmem:[#allocation8 + $0x14] sm:$0xf]
    %v408 = vld [vmem:[#allocation8 + $0x18] sm:$0xf]
    %v409 = vld [vmem:[#allocation8 + $0x1c] sm:$0xf]
    %v410 = vld [vmem:[#allocation8 + $0x20] sm:$0xf]
    %v411 = vld [vmem:[#allocation8 + $0x24] sm:$0xf]
    %v412 = vld [vmem:[#allocation8 + $0x28] sm:$0xf]
    %v413 = vld [vmem:[#allocation8 + $0x2c] sm:$0xf]
    %v414 = vld [vmem:[#allocation8 + $0x30] sm:$0xf]
    %v415 = vld [vmem:[#allocation8 + $0x34] sm:$0xf]
    %v416 = vld [vmem:[#allocation8 + $0x38] sm:$0xf]
    %v417 = vld [vmem:[#allocation8 + $0x3c] sm:$0xf]
    %v418 = vunpack.c.l.bf16 %v402
    %v419 = vunpack.c.l.bf16 %v403
    %v420 = vunpack.c.l.bf16 %v404
    %v421 = vunpack.c.l.bf16 %v405
    %v422 = vunpack.c.l.bf16 %v406
    %v423 = vunpack.c.l.bf16 %v407
    %v424 = vunpack.c.l.bf16 %v408
    %v425 = vunpack.c.l.bf16 %v409
    %v426 = vunpack.c.l.bf16 %v410
    %v427 = vunpack.c.l.bf16 %v411
    %v428 = vunpack.c.l.bf16 %v412
    %v429 = vunpack.c.l.bf16 %v413
    %v430 = vunpack.c.l.bf16 %v414
    %v431 = vunpack.c.l.bf16 %v415
    %v432 = vunpack.c.l.bf16 %v416
    %v433 = vunpack.c.l.bf16 %v417
    %v434 = vperm.slane %v118, 0
    %435 = vmatpush.msra.mxu0 %v433
    %436 = vmatpush.msra.mxu0 %v432
    %437 = vmatpush.msra.mxu0 %v431
    %438 = vmatpush.msra.mxu0 %v430
    %439 = vmatpush.msra.mxu0 %v429
    %440 = vmatpush.msra.mxu0 %v428
    %441 = vmatpush.msra.mxu0 %v427
    %442 = vmatpush.msra.mxu0 %v426
    %443 = vmatpush.msra.mxu0 %v425
    %444 = vmatpush.msra.mxu0 %v424
    %445 = vmatpush.msra.mxu0 %v423
    %446 = vmatpush.msra.mxu0 %v422
    %447 = vmatpush.msra.mxu0 %v421
    %448 = vmatpush.msra.mxu0 %v420
    %449 = vmatpush.msra.mxu0 %v419
    %450 = vmatpush.msra.mxu0 %v418
    %451 = vmatmul.f32.gmra.mxu0 %v399
    %v452 = vpop.f32.mrf.mxu0
    %v453 = vadd.f32 %v434, %v452
    %454 = vmatmul.f32.gmra.mxu0 %v400
    %v455 = vpop.f32.mrf.mxu0
    %v456 = vadd.f32 %v434, %v455
    %457 = vmatmul.f32.gmra.mxu0 %v401
    %v458 = vpop.f32.mrf.mxu0
    %v459 = vadd.f32 %v434, %v458
    %460 = vdwg.mxu0
    %v461 = vadd.f32 %v453, %v399
    %v462 = vadd.f32 %v456, %v400
    %v463 = vadd.f32 %v459, %v401
    %v464 = vmax.f32 %v461, 0.0
    %v465 = vmax.f32 %v462, 0.0
    %v466 = vmax.f32 %v463, 0.0
    %v467 = vld [vmem:[#allocation10] sm:$0xf]
    %v468 = vld [vmem:[#allocation10 + $0x4] sm:$0xf]
    %v469 = vld [vmem:[#allocation10 + $0x8] sm:$0xf]
    %v470 = vld [vmem:[#allocation10 + $0xc] sm:$0xf]
    %v471 = vld [vmem:[#allocation10 + $0x10] sm:$0xf]
    %v472 = vld [vmem:[#allocation10 + $0x14] sm:$0xf]
    %v473 = vld [vmem:[#allocation10 + $0x18] sm:$0xf]
    %v474 = vld [vmem:[#allocation10 + $0x1c] sm:$0xf]
    %v475 = vld [vmem:[#allocation10 + $0x20] sm:$0xf]
    %v476 = vld [vmem:[#allocation10 + $0x24] sm:$0xf]
    %v477 = vld [vmem:[#allocation10 + $0x28] sm:$0xf]
    %v478 = vld [vmem:[#allocation10 + $0x2c] sm:$0xf]
    %v479 = vld [vmem:[#allocation10 + $0x30] sm:$0xf]
    %v480 = vld [vmem:[#allocation10 + $0x34] sm:$0xf]
    %v481 = vld [vmem:[#allocation10 + $0x38] sm:$0xf]
    %v482 = vld [vmem:[#allocation10 + $0x3c] sm:$0xf]
    %v483 = vunpack.c.l.bf16 %v467
    %v484 = vunpack.c.l.bf16 %v468
    %v485 = vunpack.c.l.bf16 %v469
    %v486 = vunpack.c.l.bf16 %v470
    %v487 = vunpack.c.l.bf16 %v471
    %v488 = vunpack.c.l.bf16 %v472
    %v489 = vunpack.c.l.bf16 %v473
    %v490 = vunpack.c.l.bf16 %v474
    %v491 = vunpack.c.l.bf16 %v475
    %v492 = vunpack.c.l.bf16 %v476
    %v493 = vunpack.c.l.bf16 %v477
    %v494 = vunpack.c.l.bf16 %v478
    %v495 = vunpack.c.l.bf16 %v479
    %v496 = vunpack.c.l.bf16 %v480
    %v497 = vunpack.c.l.bf16 %v481
    %v498 = vunpack.c.l.bf16 %v482
    %s499 = scalar_lea.vmem [#allocation10], 64
    %v500 = vld [vmem:[%s499] sm:$0xf]
    %v501 = vld [vmem:[%s499 + $0x4] sm:$0xf]
    %v502 = vld [vmem:[%s499 + $0x8] sm:$0xf]
    %v503 = vld [vmem:[%s499 + $0xc] sm:$0xf]
    %v504 = vld [vmem:[%s499 + $0x10] sm:$0xf]
    %v505 = vld [vmem:[%s499 + $0x14] sm:$0xf]
    %v506 = vld [vmem:[%s499 + $0x18] sm:$0xf]
    %v507 = vld [vmem:[%s499 + $0x1c] sm:$0xf]
    %v508 = vld [vmem:[%s499 + $0x20] sm:$0xf]
    %v509 = vld [vmem:[%s499 + $0x24] sm:$0xf]
    %v510 = vld [vmem:[%s499 + $0x28] sm:$0xf]
    %v511 = vld [vmem:[%s499 + $0x2c] sm:$0xf]
    %v512 = vld [vmem:[%s499 + $0x30] sm:$0xf]
    %v513 = vld [vmem:[%s499 + $0x34] sm:$0xf]
    %v514 = vld [vmem:[%s499 + $0x38] sm:$0xf]
    %v515 = vld [vmem:[%s499 + $0x3c] sm:$0xf]
    %v516 = vunpack.c.l.bf16 %v500
    %v517 = vunpack.c.l.bf16 %v501
    %v518 = vunpack.c.l.bf16 %v502
    %v519 = vunpack.c.l.bf16 %v503
    %v520 = vunpack.c.l.bf16 %v504
    %v521 = vunpack.c.l.bf16 %v505
    %v522 = vunpack.c.l.bf16 %v506
    %v523 = vunpack.c.l.bf16 %v507
    %v524 = vunpack.c.l.bf16 %v508
    %v525 = vunpack.c.l.bf16 %v509
    %v526 = vunpack.c.l.bf16 %v510
    %v527 = vunpack.c.l.bf16 %v511
    %v528 = vunpack.c.l.bf16 %v512
    %v529 = vunpack.c.l.bf16 %v513
    %v530 = vunpack.c.l.bf16 %v514
    %v531 = vunpack.c.l.bf16 %v515
    %s532 = scalar_lea.vmem [#allocation10], 128
    %v533 = vld [vmem:[%s532] sm:$0xf]
    %v534 = vld [vmem:[%s532 + $0x4] sm:$0xf]
    %v535 = vld [vmem:[%s532 + $0x8] sm:$0xf]
    %v536 = vld [vmem:[%s532 + $0xc] sm:$0xf]
    %v537 = vld [vmem:[%s532 + $0x10] sm:$0xf]
    %v538 = vld [vmem:[%s532 + $0x14] sm:$0xf]
    %v539 = vld [vmem:[%s532 + $0x18] sm:$0xf]
    %v540 = vld [vmem:[%s532 + $0x1c] sm:$0xf]
    %v541 = vld [vmem:[%s532 + $0x20] sm:$0xf]
    %v542 = vld [vmem:[%s532 + $0x24] sm:$0xf]
    %v543 = vld [vmem:[%s532 + $0x28] sm:$0xf]
    %v544 = vld [vmem:[%s532 + $0x2c] sm:$0xf]
    %v545 = vld [vmem:[%s532 + $0x30] sm:$0xf]
    %v546 = vld [vmem:[%s532 + $0x34] sm:$0xf]
    %v547 = vld [vmem:[%s532 + $0x38] sm:$0xf]
    %v548 = vld [vmem:[%s532 + $0x3c] sm:$0xf]
    %v549 = vunpack.c.l.bf16 %v533
    %v550 = vunpack.c.l.bf16 %v534
    %v551 = vunpack.c.l.bf16 %v535
    %v552 = vunpack.c.l.bf16 %v536
    %v553 = vunpack.c.l.bf16 %v537
    %v554 = vunpack.c.l.bf16 %v538
    %v555 = vunpack.c.l.bf16 %v539
    %v556 = vunpack.c.l.bf16 %v540
    %v557 = vunpack.c.l.bf16 %v541
    %v558 = vunpack.c.l.bf16 %v542
    %v559 = vunpack.c.l.bf16 %v543
    %v560 = vunpack.c.l.bf16 %v544
    %v561 = vunpack.c.l.bf16 %v545
    %v562 = vunpack.c.l.bf16 %v546
    %v563 = vunpack.c.l.bf16 %v547
    %v564 = vunpack.c.l.bf16 %v548
    %v565 = vperm.slane %v119, 0
    %v566 = vadd.f32 %v565, %v464
    %v567 = vadd.f32 %v565, %v465
    %568 = vmatpush.msra.mxu0 %v498
    %569 = vmatpush.msra.mxu0 %v497
    %570 = vmatpush.msra.mxu0 %v496
    %571 = vmatpush.msra.mxu0 %v495
    %572 = vmatpush.msra.mxu0 %v494
    %573 = vmatpush.msra.mxu0 %v493
    %574 = vmatpush.msra.mxu0 %v492
    %575 = vmatpush.msra.mxu0 %v491
    %576 = vmatpush.msra.mxu0 %v490
    %577 = vmatpush.msra.mxu0 %v489
    %578 = vmatpush.msra.mxu0 %v488
    %579 = vmatpush.msra.mxu0 %v487
    %580 = vmatpush.msra.mxu0 %v486
    %581 = vmatpush.msra.mxu0 %v485
    %582 = vmatpush.msra.mxu0 %v484
    %583 = vmatpush.msra.mxu0 %v483
    %584 = vmatmul.f32.gmra.mxu0 %v464
    %v585 = vpop.f32.mrf.mxu0
    %v586 = vadd.f32 0.0, %v585
    %587 = vdwg.mxu0
    %v589 = vrot.slane %v586, 6
    %v591 = vadd.f32 %v566, %v589
    %v592 = vadd.f32 %v567, %v589
    %vm595 = vcmask 1046528
    %v596 = vrot.slane %v464, 1
    %v597 = vrot.slane %v465, 1
    %v598 = vsel %vm595, %v596, %v597
    %600 = vmatpush.msra.mxu0 %v531
    %601 = vmatpush.msra.mxu0 %v530
    %602 = vmatpush.msra.mxu0 %v529
    %603 = vmatpush.msra.mxu0 %v528
    %604 = vmatpush.msra.mxu0 %v527
    %605 = vmatpush.msra.mxu0 %v526
    %606 = vmatpush.msra.mxu0 %v525
    %607 = vmatpush.msra.mxu0 %v524
    %608 = vmatpush.msra.mxu0 %v523
    %609 = vmatpush.msra.mxu0 %v522
    %610 = vmatpush.msra.mxu0 %v521
    %611 = vmatpush.msra.mxu0 %v520
    %612 = vmatpush.msra.mxu0 %v519
    %613 = vmatpush.msra.mxu0 %v518
    %614 = vmatpush.msra.mxu0 %v517
    %615 = vmatpush.msra.mxu0 %v516
    %616 = vmatmul.f32.gmra.mxu0 %v598
    %v617 = vpop.f32.mrf.mxu0
    %v618 = vadd.f32 0.0, %v617
    %619 = vdwg.mxu0
    %v621 = vrot.slane %v618, 6
    %v623 = vadd.f32 %v591, %v621
    %v624 = vadd.f32 %v592, %v621
    %vm625 = vcmask 1045504
    %v626 = vrot.slane %v464, 2
    %v627 = vrot.slane %v465, 2
    %v628 = vsel %vm625, %v626, %v627
    %630 = vmatpush.msra.mxu0 %v564
    %631 = vmatpush.msra.mxu0 %v563
    %632 = vmatpush.msra.mxu0 %v562
    %633 = vmatpush.msra.mxu0 %v561
    %634 = vmatpush.msra.mxu0 %v560
    %635 = vmatpush.msra.mxu0 %v559
    %636 = vmatpush.msra.mxu0 %v558
    %637 = vmatpush.msra.mxu0 %v557
    %638 = vmatpush.msra.mxu0 %v556
    %639 = vmatpush.msra.mxu0 %v555
    %640 = vmatpush.msra.mxu0 %v554
    %641 = vmatpush.msra.mxu0 %v553
    %642 = vmatpush.msra.mxu0 %v552
    %643 = vmatpush.msra.mxu0 %v551
    %644 = vmatpush.msra.mxu0 %v550
    %645 = vmatpush.msra.mxu0 %v549
    %646 = vmatmul.f32.gmra.mxu0 %v628
    %v647 = vpop.f32.mrf.mxu0
    %v648 = vadd.f32 0.0, %v647
    %649 = vdwg.mxu0
    %v651 = vrot.slane %v648, 6
    %v653 = vadd.f32 %v623, %v651
    %v654 = vadd.f32 %v624, %v651
    %v655 = vmax.f32 %v653, 0.0
    %v656 = vmax.f32 %v654, 0.0
    %vm657 = vcmask 1047554
    %v658 = vsel %vm657, %v655, 0.0
    %659 = vadd.xlane.f32.xlu0 %v658
    %v660 = vpop.xlane.xlu0 %659
    %vm661 = vcmask 1041408
    %v662 = vsel %vm661, %v656, 0.0
    %663 = vadd.xlane.f32.xlu0 %v662
    %v664 = vpop.xlane.xlu0 %663
    %v665 = vrcp.pop 128.0
    %v666 = vmul.f32 128.0, %v665
    %v667 = vsub.f32 1.0, %v666
    %v668 = vmul.f32 %v665, %v667
    %v669 = vadd.f32 %v665, %v668
    %vm670 = vweird.f32 %v665
    %v671 = vsel %vm670, %v665, %v669
    %v672 = vmul.f32 %v660, %v671
    %v673 = vmul.f32 %v664, %v671
    %v674 = vsub.f32 %v655, %v672
    %v675 = vsub.f32 %v656, %v673
    %v676 = vmul.f32 %v674, %v674
    %v677 = vmul.f32 %v675, %v675
    %v678 = vsel %vm657, %v676, 0.0
    %679 = vadd.xlane.f32.xlu0 %v678
    %v680 = vpop.xlane.xlu0 %679
    %v681 = vsel %vm661, %v677, 0.0
    %682 = vadd.xlane.f32.xlu0 %v681
    %v683 = vpop.xlane.xlu0 %682
    %v684 = vmul.f32 %v680, %v671
    %v685 = vmul.f32 %v683, %v671
    %v686 = vadd.f32 %v684, 1e-05
    %v687 = vadd.f32 %v685, 1e-05
    %v688 = vrsqrt.pop %v686
    %v689 = vmul.f32 %v688, %v686
    %v690 = vmul.f32 %v689, %v688
    %v691 = vmul.f32 0.5, %v690
    %v692 = vsub.f32 1.5, %v691
    %v693 = vmul.f32 %v688, %v692
    %vm694 = vweird.f32 %v686
    %vm695 = vweird.f32 %v688
    %vm696 = vmor %vm694, %vm695
    %v697 = vsel %vm696, %v688, %v693
    %v698 = vrsqrt.pop %v687
    %v699 = vmul.f32 %v698, %v687
    %v700 = vmul.f32 %v699, %v698
    %v701 = vmul.f32 0.5, %v700
    %v702 = vsub.f32 1.5, %v701
    %v703 = vmul.f32 %v698, %v702
    %vm704 = vweird.f32 %v687
    %vm705 = vweird.f32 %v698
    %vm706 = vmor %vm704, %vm705
    %v707 = vsel %vm706, %v698, %v703
    %v708 = vmul.f32 %v674, %v697
    %v709 = vmul.f32 %v675, %v707
    %v710 = vperm.slane %v120, 0
    %v711 = vmul.f32 %v708, %v710
    %v712 = vmul.f32 %v709, %v710
    %v713 = vperm.slane %v121, 0
    %v714 = vadd.f32 %v711, %v713
    %v715 = vadd.f32 %v712, %v713
    %716 = vst [vmem:[#allocation13 - $0x2] sm:$0xfc] %v714
    %717 = vst [vmem:[#allocation13 + $0x6] sm:$0x3] %v715
    %v718 = vadd.f32 %v565, %v466
    %v720 = vrot.slane %v466, 2
    %v721 = vsel %vm625, %v627, %v720
    %723 = vmatpush.msra.mxu0 %v498
    %724 = vmatpush.msra.mxu0 %v497
    %725 = vmatpush.msra.mxu0 %v496
    %726 = vmatpush.msra.mxu0 %v495
    %727 = vmatpush.msra.mxu0 %v494
    %728 = vmatpush.msra.mxu0 %v493
    %729 = vmatpush.msra.mxu0 %v492
    %730 = vmatpush.msra.mxu0 %v491
    %731 = vmatpush.msra.mxu0 %v490
    %732 = vmatpush.msra.mxu0 %v489
    %733 = vmatpush.msra.mxu0 %v488
    %734 = vmatpush.msra.mxu0 %v487
    %735 = vmatpush.msra.mxu0 %v486
    %736 = vmatpush.msra.mxu0 %v485
    %737 = vmatpush.msra.mxu0 %v484
    %738 = vmatpush.msra.mxu0 %v483
    %739 = vmatmul.f32.gmra.mxu0 %v721
    %v740 = vpop.f32.mrf.mxu0
    %v741 = vadd.f32 0.0, %v740
    %742 = vdwg.mxu0
    %v744 = vrot.slane %v741, 4
    %v746 = vadd.f32 %v567, %v744
    %v747 = vadd.f32 %v718, %v744
    %vm748 = vcmask 1044480
    %v749 = vrot.slane %v465, 3
    %v750 = vrot.slane %v466, 3
    %v751 = vsel %vm748, %v749, %v750
    %753 = vmatpush.msra.mxu0 %v531
    %754 = vmatpush.msra.mxu0 %v530
    %755 = vmatpush.msra.mxu0 %v529
    %756 = vmatpush.msra.mxu0 %v528
    %757 = vmatpush.msra.mxu0 %v527
    %758 = vmatpush.msra.mxu0 %v526
    %759 = vmatpush.msra.mxu0 %v525
    %760 = vmatpush.msra.mxu0 %v524
    %761 = vmatpush.msra.mxu0 %v523
    %762 = vmatpush.msra.mxu0 %v522
    %763 = vmatpush.msra.mxu0 %v521
    %764 = vmatpush.msra.mxu0 %v520
    %765 = vmatpush.msra.mxu0 %v519
    %766 = vmatpush.msra.mxu0 %v518
    %767 = vmatpush.msra.mxu0 %v517
    %768 = vmatpush.msra.mxu0 %v516
    %769 = vmatmul.f32.gmra.mxu0 %v751
    %v770 = vpop.f32.mrf.mxu0
    %v771 = vadd.f32 0.0, %v770
    %772 = vdwg.mxu0
    %v774 = vrot.slane %v771, 4
    %v776 = vadd.f32 %v746, %v774
    %v777 = vadd.f32 %v747, %v774
    %vm778 = vcmask 1043456
    %v779 = vrot.slane %v465, 4
    %v780 = vrot.slane %v466, 4
    %v781 = vsel %vm778, %v779, %v780
    %783 = vmatpush.msra.mxu0 %v564
    %784 = vmatpush.msra.mxu0 %v563
    %785 = vmatpush.msra.mxu0 %v562
    %786 = vmatpush.msra.mxu0 %v561
    %787 = vmatpush.msra.mxu0 %v560
    %788 = vmatpush.msra.mxu0 %v559
    %789 = vmatpush.msra.mxu0 %v558
    %790 = vmatpush.msra.mxu0 %v557
    %791 = vmatpush.msra.mxu0 %v556
    %792 = vmatpush.msra.mxu0 %v555
    %793 = vmatpush.msra.mxu0 %v554
    %794 = vmatpush.msra.mxu0 %v553
    %795 = vmatpush.msra.mxu0 %v552
    %796 = vmatpush.msra.mxu0 %v551
    %797 = vmatpush.msra.mxu0 %v550
    %798 = vmatpush.msra.mxu0 %v549
    %799 = vmatmul.f32.gmra.mxu0 %v781
    %v800 = vpop.f32.mrf.mxu0
    %v801 = vadd.f32 0.0, %v800
    %802 = vdwg.mxu0
    %v804 = vrot.slane %v801, 4
    %v806 = vadd.f32 %v776, %v804
    %v807 = vadd.f32 %v777, %v804
    %v808 = vmax.f32 %v806, 0.0
    %v809 = vmax.f32 %v807, 0.0
    %vm810 = vcmask 1047556
    %v811 = vsel %vm810, %v808, 0.0
    %812 = vadd.xlane.f32.xlu0 %v811
    %v813 = vpop.xlane.xlu0 %812
    %v814 = vsel %vm778, %v809, 0.0
    %815 = vadd.xlane.f32.xlu0 %v814
    %v816 = vpop.xlane.xlu0 %815
    %v817 = vmul.f32 %v813, %v671
    %v818 = vmul.f32 %v816, %v671
    %v819 = vsub.f32 %v808, %v817
    %v820 = vsub.f32 %v809, %v818
    %v821 = vmul.f32 %v819, %v819
    %v822 = vmul.f32 %v820, %v820
    %v823 = vsel %vm810, %v821, 0.0
    %824 = vadd.xlane.f32.xlu0 %v823
    %v825 = vpop.xlane.xlu0 %824
    %v826 = vsel %vm778, %v822, 0.0
    %827 = vadd.xlane.f32.xlu0 %v826
    %v828 = vpop.xlane.xlu0 %827
    %v829 = vmul.f32 %v825, %v671
    %v830 = vmul.f32 %v828, %v671
    %v831 = vadd.f32 %v829, 1e-05
    %v832 = vadd.f32 %v830, 1e-05
    %v833 = vrsqrt.pop %v831
    %v834 = vmul.f32 %v833, %v831
    %v835 = vmul.f32 %v834, %v833
    %v836 = vmul.f32 0.5, %v835
    %v837 = vsub.f32 1.5, %v836
    %v838 = vmul.f32 %v833, %v837
    %vm839 = vweird.f32 %v831
    %vm840 = vweird.f32 %v833
    %vm841 = vmor %vm839, %vm840
    %v842 = vsel %vm841, %v833, %v838
    %v843 = vrsqrt.pop %v832
    %v844 = vmul.f32 %v843, %v832
    %v845 = vmul.f32 %v844, %v843
    %v846 = vmul.f32 0.5, %v845
    %v847 = vsub.f32 1.5, %v846
    %v848 = vmul.f32 %v843, %v847
    %vm849 = vweird.f32 %v832
    %vm850 = vweird.f32 %v843
    %vm851 = vmor %vm849, %vm850
    %v852 = vsel %vm851, %v843, %v848
    %v853 = vmul.f32 %v819, %v842
    %v854 = vmul.f32 %v820, %v852
    %v855 = vmul.f32 %v853, %v710
    %v856 = vmul.f32 %v854, %v710
    %v857 = vadd.f32 %v855, %v713
    %v858 = vadd.f32 %v856, %v713
    %s859 = scalar_lea.vmem [#allocation13], 8
    %860 = vst [vmem:[%s859 - $0x4] sm:$0xf0] %v857
    %861 = vst [vmem:[%s859 + $0x4] sm:$0xf] %v858
    // Predicated region
    $region50: #{tpu_custom_call.1} parent=1 // pred_check
      _
    $region51: #{tpu_custom_call.1} parent=1 // pred_check_branch
      %863 = sbr.rel (0) target = $region53
    $region52: #{tpu_custom_call.1} parent=1 // pred_region
      %865 = vsyncadd [#allocation4], 0
      %s866 = sshll.u32 [#allocation13], 4
      %s867 = int_to_ptr.vmem [resolvable:$true] %s866
      %s868 = sshll.u32 %s6, 4
      %s869 = int_to_ptr.hbm [resolvable:$true] %s868
      %874 = dma.vmem_to_hbm [thread:$0]  %s867, 256, %s869, [#allocation4], 128, 128, 8
    $region53: #{tpu_custom_call.1} parent=1 // pred_fallthru
      _
    // Predicated region
    $region54: #{tpu_custom_call.1} parent=1 // pred_check
      _
    $region55: #{tpu_custom_call.1} parent=1 // pred_check_branch
      %876 = sbr.rel (0) target = $region57
    $region56: #{tpu_custom_call.1} parent=1 // pred_region
      %878 = dma.done [#allocation4], 256
    $region57: #{tpu_custom_call.1} parent=1 // pred_fallthru
      _
    %879 = vsyncpa [#allocation3], 1
    %880 = vsyncpa [#allocation6], 1
    %881 = vsyncpa [#allocation9], 1
    %882 = vsyncpa [#allocation12], 1
    %883 = vsyncpa [#allocation4], 1

</llo_original>
